<compile_context>
chip_gen: v7x
topology: tpu7x:2x2x1
jax: 0.10.0
libtpu: 0.0.40
codegen_flags: <defaults>
</compile_context>

<pallas_src>
import functools

import jax
import jax.numpy as jnp
from jax.experimental import pallas as pl
from jax.experimental.pallas import tpu as pltpu

_LANES = 128
_SUBLANES = 8


def _int_pow(x, k):
    # small positive integer power via repeated multiplies (stays on the VALU)
    r = x
    for _ in range(k - 1):
        r = r * x
    return r


def _fold_rows(x, tile_r):
    """(N, tile_r, 128) -> (N, 8, 128) via a pairwise tree of 8-row slab adds."""
    parts = [x[:, i * _SUBLANES:(i + 1) * _SUBLANES, :]
             for i in range(tile_r // _SUBLANES)]
    while len(parts) > 1:
        nxt = [a + b for a, b in zip(parts[0::2], parts[1::2])]
        if len(parts) % 2:
            nxt.append(parts[-1])
        parts = nxt
    return parts[0]


def _dice_partial_kernel(p_ref, t_ref, num_ref, den_ref, *,
                         power, tile_r, r_valid, n_k):
    k = pl.program_id(0)

    @pl.when(k == 0)
    def _():
        num_ref[...] = jnp.zeros_like(num_ref)
        den_ref[...] = jnp.zeros_like(den_ref)

    def _accumulate(mask_rows):
        p = p_ref[...].astype(jnp.float32)
        t = t_ref[...].astype(jnp.float32)
        if mask_rows:
            # Zero sublane-rows past the true row count R. Only the last
            # (possibly overrunning) tile runs this path (see gating below),
            # so garbage from the partial block never reaches the sums.
            row = jax.lax.broadcasted_iota(jnp.int32, p.shape, 1)
            valid = (k * tile_r + row) < r_valid
            p = jnp.where(valid, p, 0.0)
            t = jnp.where(valid, t, 0.0)

        prod = p * t
        if power == 2:
            sq = p * p + t * t
        elif isinstance(power, int) and power >= 1:
            sq = _int_pow(p, power) + _int_pow(t, power)
        else:
            sq = p ** power + t ** power  # generic float pow (matches torch.pow semantics)

        num_ref[...] += _fold_rows(prod, tile_r)
        den_ref[...] += _fold_rows(sq, tile_r)

    if n_k * tile_r != r_valid:
        # Ragged row tail: only the last tile pays for the masking ops.
        @pl.when(k == n_k - 1)
        def _():
            _accumulate(True)

        @pl.when(k != n_k - 1)
        def _():
            _accumulate(False)
    else:
        _accumulate(False)


def _vmem_capacity_bytes():
    try:
        cap = getattr(pltpu.get_tpu_info(), "vmem_capacity_bytes", None)
        if cap:
            return int(cap)
    except Exception:
        pass
    return 64 * 1024 * 1024  # conservative default (v7x per-TensorCore VMEM)


def binary_dice_loss(predict, target, smooth=1.0, p=2, reduction='mean',
                     max_tile_rows=None):
    """Pallas implementation of BinaryDiceLoss.forward."""
    assert predict.shape[0] == target.shape[0], "predict & target batch size don't match"
    n = predict.shape[0]
    p2 = predict.reshape(n, -1)
    t2 = target.reshape(n, -1)
    d = p2.shape[1]

    # ---- sublane-rich layout: (N, D) -> (N, R, 128) ---------------------------
    r = pl.cdiv(d, _LANES)
    d_pad = r * _LANES
    if d_pad != d:
        # Ragged lane tail: zero-pad (<128 elems per row). Zeros contribute
        # nothing to numerator or denominator, so no lane masking is needed.
        p2 = jnp.pad(p2, ((0, 0), (0, d_pad - d)))
        t2 = jnp.pad(t2, ((0, 0), (0, d_pad - d)))
    p3 = p2.reshape(n, r, _LANES)   # free, row-major contiguous
    t3 = t2.reshape(n, r, _LANES)

    # ---- payload-driven tile height (multiple of 8 sublanes) ------------------
    vmem_cap = _vmem_capacity_bytes()
    budget = vmem_cap // 3                               # input blocks + f32 temps
    in_itemsize = max(p3.dtype.itemsize, t3.dtype.itemsize)
    # per row-of-128 lanes: 2 inputs x 2 pipeline buffers (input dtype) + ~4 f32 temps
    bytes_per_row = n * _LANES * (2 * 2 * in_itemsize + 4 * 4)
    max_rows = max(_SUBLANES, (budget // bytes_per_row) // _SUBLANES * _SUBLANES)
    if max_tile_rows is not None:
        max_rows = min(max_rows,
                       max(_SUBLANES, (int(max_tile_rows) // _SUBLANES) * _SUBLANES))
    r8 = pl.cdiv(r, _SUBLANES) * _SUBLANES
    tile_r = min(r8, max_rows)          # always a multiple of 8
    n_k = pl.cdiv(r, tile_r)            # single grid step for small problems

    kernel = functools.partial(
        _dice_partial_kernel, power=p, tile_r=tile_r, r_valid=r, n_k=n_k)

    vmem_limit = max(32 * 1024 * 1024,
                     min(vmem_cap - (8 << 20), 100 * 1024 * 1024))

    num_out, den_out = pl.pallas_call(
        kernel,
        out_shape=(jax.ShapeDtypeStruct((n, _SUBLANES, _LANES), jnp.float32),
                   jax.ShapeDtypeStruct((n, _SUBLANES, _LANES), jnp.float32)),
        grid_spec=pltpu.PrefetchScalarGridSpec(
            num_scalar_prefetch=0,
            grid=(n_k,),
            in_specs=[
                pl.BlockSpec((n, tile_r, _LANES), lambda k: (0, k, 0)),
                pl.BlockSpec((n, tile_r, _LANES), lambda k: (0, k, 0)),
            ],
            out_specs=[
                pl.BlockSpec((n, _SUBLANES, _LANES), lambda k: (0, 0, 0)),
                pl.BlockSpec((n, _SUBLANES, _LANES), lambda k: (0, 0, 0)),
            ],
        ),
        # TODO(synk): on multi-TensorCore parts (v7x) a CORE_PARALLEL split of the row
        # axis (one resident accumulator per core) would engage both TCs for very large
        # D; the single "arbitrary" axis here keeps the kernel portable across chips.
        compiler_params=pltpu.CompilerParams(
            dimension_semantics=("arbitrary",),
            vmem_limit_bytes=vmem_limit,
        ),
    )(p3, t3)

    # ---- tiny finalize in plain JAX (N x 8 x 128 per accumulator) -------------
    num = 2.0 * jnp.sum(num_out, axis=(1, 2)) + smooth   # (N,)
    den = jnp.sum(den_out, axis=(1, 2)) + smooth         # (N,)
    loss = 1.0 - num / den
    if reduction == 'mean':
        return jnp.mean(loss)
    elif reduction == 'sum':
        return jnp.sum(loss)
    elif reduction == 'none':
        return loss
    else:
        raise Exception('Unexpected reduction {}'.format(reduction))


def binary_dice_loss_ref(predict, target, smooth=1.0, p=2, reduction='mean'):
    n = predict.shape[0]
    pr = predict.reshape(n, -1).astype(jnp.float32)
    tg = target.reshape(n, -1).astype(jnp.float32)
    num = 2.0 * jnp.sum(pr * tg, axis=1) + smooth
    den = jnp.sum(pr ** p + tg ** p, axis=1) + smooth
    loss = 1.0 - num / den
    if reduction == 'mean':
        return jnp.mean(loss)
    elif reduction == 'sum':
        return jnp.sum(loss)
    return loss


if __name__ == "__main__":
    key = jax.random.PRNGKey(0)
    ks = jax.random.split(key, 6)

    # 1) Primary case: NCHW = (2, 4, 16, 16) -> D = 1024. Free (N, 8, 128) reshape,
    #    single grid step, no masking, full vregs.
    predict = jax.nn.sigmoid(jax.random.normal(ks[0], (2, 4, 16, 16), dtype=jnp.float32))
    target = (jax.random.uniform(ks[1], (2, 4, 16, 16)) > 0.5).astype(jnp.float32)
    out = jax.block_until_ready(binary_dice_loss(predict, target))
    ref = binary_dice_loss_ref(predict, target)
    assert jnp.allclose(out, ref, atol=1e-5, rtol=1e-5), (out, ref)

    # 2) Ragged D = 4*50*100 = 20000: lane-tail zero-pad + gated row masking
    #    (R = 157 rows, single partial tile of 160 rows).
    predict2 = jax.nn.sigmoid(jax.random.normal(ks[2], (2, 4, 50, 100), dtype=jnp.float32))
    target2 = (jax.random.uniform(ks[3], (2, 4, 50, 100)) > 0.5).astype(jnp.float32)
    out2 = jax.block_until_ready(binary_dice_loss(predict2, target2))
    ref2 = binary_dice_loss_ref(predict2, target2)
    assert jnp.allclose(out2, ref2, atol=1e-5, rtol=1e-5), (out2, ref2)

    # 3) Multi-step reduction path (forced small tile): D = 8*32*128 -> R = 256,
    #    tile_r = 64 -> 4 grid steps, unmasked accumulate + k==0 init gating.
    predict3 = jax.nn.sigmoid(jax.random.normal(ks[4], (2, 8, 32, 128), dtype=jnp.float32))
    target3 = (jax.random.uniform(ks[5], (2, 8, 32, 128)) > 0.5).astype(jnp.float32)
    out3 = jax.block_until_ready(
        binary_dice_loss(predict3, target3, reduction='none', max_tile_rows=64))
    ref3 = binary_dice_loss_ref(predict3, target3, reduction='none')
    assert jnp.allclose(out3, ref3, atol=1e-5, rtol=1e-5), (out3, ref3)

    # 4) Ragged + multi-step with masked LAST tile only: R = 157, tile_r = 64 -> 3 steps.
    out4 = jax.block_until_ready(
        binary_dice_loss(predict2, target2, reduction='sum', max_tile_rows=64))
    ref4 = binary_dice_loss_ref(predict2, target2, reduction='sum')
    assert jnp.allclose(out4, ref4, atol=1e-5, rtol=1e-5), (out4, ref4)

    print("KERNEL_OK")
</pallas_src>

<mosaic_0001>
module attributes {stable_mosaic.version = 11 : i64} {
  func.func @_dice_partial_kernel(%arg0: i32, %arg1: memref<2x8x128xf32, #tpu.memory_space<vmem>>, %arg2: memref<2x8x128xf32, #tpu.memory_space<vmem>>, %arg3: memref<2x8x128xf32, #tpu.memory_space<vmem>>, %arg4: memref<2x8x128xf32, #tpu.memory_space<vmem>>) attributes {dimension_semantics = [#tpu.dimension_semantics<arbitrary>], iteration_bounds = array<i64: 1>, scalar_prefetch = 0 : i64, scratch_operands = 0 : i64, tpu.core_type = #tpu.core_type<tc>, window_params = [{transform_indices = @transform_0, window_bounds = array<i64: 2, 8, 128>}, {transform_indices = @transform_1, window_bounds = array<i64: 2, 8, 128>}, {pipeline_mode = #tpu.pipeline_mode<synchronous>, transform_indices = @transform_2, window_bounds = array<i64: 2, 8, 128>}, {pipeline_mode = #tpu.pipeline_mode<synchronous>, transform_indices = @transform_3, window_bounds = array<i64: 2, 8, 128>}]} {
    %c0_i32 = arith.constant 0 : i32
    %0 = arith.cmpi eq, %arg0, %c0_i32 : i32
    %1 = arith.extui %0 : i1 to i32
    %c0_i32_0 = arith.constant 0 : i32
    %2 = arith.cmpi ne, %1, %c0_i32_0 : i32
    scf.if %2 {
      %cst = arith.constant 0.000000e+00 : f32
      %15 = vector.broadcast %cst : f32 to vector<2x8x128xf32>
      %c0_18 = arith.constant 0 : index
      %c0_19 = arith.constant 0 : index
      %c0_20 = arith.constant 0 : index
      %16 = vector.load %arg3[%c0_18, %c0_19, %c0_20] : memref<2x8x128xf32, #tpu.memory_space<vmem>>, vector<2x8x128xf32>
      tpu.vector_store %arg3[%c0_18, %c0_19, %c0_20], %15 {strides = array<i32>} : memref<2x8x128xf32, #tpu.memory_space<vmem>>, vector<2x8x128xf32>,
      %cst_21 = arith.constant 0.000000e+00 : f32
      %17 = vector.broadcast %cst_21 : f32 to vector<2x8x128xf32>
      %c0_22 = arith.constant 0 : index
      %c0_23 = arith.constant 0 : index
      %c0_24 = arith.constant 0 : index
      %18 = vector.load %arg4[%c0_22, %c0_23, %c0_24] : memref<2x8x128xf32, #tpu.memory_space<vmem>>, vector<2x8x128xf32>
      tpu.vector_store %arg4[%c0_22, %c0_23, %c0_24], %17 {strides = array<i32>} : memref<2x8x128xf32, #tpu.memory_space<vmem>>, vector<2x8x128xf32>,
    } else {
    }
    %c0 = arith.constant 0 : index
    %c0_1 = arith.constant 0 : index
    %c0_2 = arith.constant 0 : index
    %3 = vector.load %arg1[%c0, %c0_1, %c0_2] : memref<2x8x128xf32, #tpu.memory_space<vmem>>, vector<2x8x128xf32>
    %c0_3 = arith.constant 0 : index
    %c0_4 = arith.constant 0 : index
    %c0_5 = arith.constant 0 : index
    %4 = vector.load %arg2[%c0_3, %c0_4, %c0_5] : memref<2x8x128xf32, #tpu.memory_space<vmem>>, vector<2x8x128xf32>
    %5 = arith.mulf %3, %4 : vector<2x8x128xf32>
    %6 = arith.mulf %3, %3 : vector<2x8x128xf32>
    %7 = arith.mulf %4, %4 : vector<2x8x128xf32>
    %8 = arith.addf %6, %7 : vector<2x8x128xf32>
    %c0_6 = arith.constant 0 : index
    %c0_7 = arith.constant 0 : index
    %c0_8 = arith.constant 0 : index
    %9 = vector.load %arg3[%c0_6, %c0_7, %c0_8] : memref<2x8x128xf32, #tpu.memory_space<vmem>>, vector<2x8x128xf32>
    %10 = arith.addf %9, %5 : vector<2x8x128xf32>
    %c0_9 = arith.constant 0 : index
    %c0_10 = arith.constant 0 : index
    %c0_11 = arith.constant 0 : index
    %11 = vector.load %arg3[%c0_9, %c0_10, %c0_11] : memref<2x8x128xf32, #tpu.memory_space<vmem>>, vector<2x8x128xf32>
    tpu.vector_store %arg3[%c0_9, %c0_10, %c0_11], %10 {strides = array<i32>} : memref<2x8x128xf32, #tpu.memory_space<vmem>>, vector<2x8x128xf32>,
    %c0_12 = arith.constant 0 : index
    %c0_13 = arith.constant 0 : index
    %c0_14 = arith.constant 0 : index
    %12 = vector.load %arg4[%c0_12, %c0_13, %c0_14] : memref<2x8x128xf32, #tpu.memory_space<vmem>>, vector<2x8x128xf32>
    %13 = arith.addf %12, %8 : vector<2x8x128xf32>
    %c0_15 = arith.constant 0 : index
    %c0_16 = arith.constant 0 : index
    %c0_17 = arith.constant 0 : index
    %14 = vector.load %arg4[%c0_15, %c0_16, %c0_17] : memref<2x8x128xf32, #tpu.memory_space<vmem>>, vector<2x8x128xf32>
    tpu.vector_store %arg4[%c0_15, %c0_16, %c0_17], %13 {strides = array<i32>} : memref<2x8x128xf32, #tpu.memory_space<vmem>>, vector<2x8x128xf32>,
    return
  }
  func.func @transform_0(%arg0: i32) -> (i32, i32, i32) {
    %c0_i32 = arith.constant 0 : i32
    %c0_i32_0 = arith.constant 0 : i32
    %c0_i32_1 = arith.constant 0 : i32
    return %c0_i32, %arg0, %c0_i32_0 : i32, i32, i32
  }
  func.func @transform_1(%arg0: i32) -> (i32, i32, i32) {
    %c0_i32 = arith.constant 0 : i32
    %c0_i32_0 = arith.constant 0 : i32
    %c0_i32_1 = arith.constant 0 : i32
    return %c0_i32, %arg0, %c0_i32_0 : i32, i32, i32
  }
  func.func @transform_2(%arg0: i32) -> (i32, i32, i32) {
    %c0_i32 = arith.constant 0 : i32
    %c0_i32_0 = arith.constant 0 : i32
    %c0_i32_1 = arith.constant 0 : i32
    %c0_i32_2 = arith.constant 0 : i32
    return %c0_i32, %c0_i32_0, %c0_i32_1 : i32, i32, i32
  }
  func.func @transform_3(%arg0: i32) -> (i32, i32, i32) {
    %c0_i32 = arith.constant 0 : i32
    %c0_i32_0 = arith.constant 0 : i32
    %c0_i32_1 = arith.constant 0 : i32
    %c0_i32_2 = arith.constant 0 : i32
    return %c0_i32, %c0_i32_0, %c0_i32_1 : i32, i32, i32
  }
}

</mosaic_0001>

<llo_original>
// kernel: tpu_custom_call.1
$region0: #{tpu_custom_call.1}
  #allocation0 [shape = 'u32[]', space=smem, size = 0x4, offset = 0x4, fixed_abs, tag = 'smem constant byte address 0x4 - core index']
  #allocation1 [shape = 'u32[144,128]{1,0:T(1,128)}', space=vmem, size = 0x12000, scoped, tag = 'internal scratch']
  %s0 = inlined_call_operand.hbm [shape: f32[2,8,128], index: 0, kind: input, shape index: {}]
  %s1 = inlined_call_operand.hbm [shape: f32[2,8,128], index: 1, kind: input, shape index: {}]
  %s2 = inlined_call_operand.hbm [shape: f32[2,8,128], index: 2, kind: output, shape index: {0}]
  %s3 = inlined_call_operand.hbm [shape: f32[2,8,128], index: 3, kind: output, shape index: {1}]
  %4 = xla_tuple %s2, %s3
  %s5 = sld [smem:[#allocation0]]
  $region38: #{tpu_custom_call.1} parent=0
    _
  %s7 = ssub.s32 1, %s5
  %s8 = scalar_select 0, %s7, %s5
  $region1: #{tpu_custom_call.1} parent=0
    #allocation2 [shape = 'u8[8192]{0}', space=vmem, size = 0x2000, scoped, tag = 'input window, operand 0, single buffered']
    #allocation3 [shape = 's32[1]{0}', space=sflag, size = 0x4, scoped, tag = 'scoped memory for tpu_custom_call.1']
    #allocation4 [shape = 's32[1]{0}', space=sflag, size = 0x4, scoped, tag = 'scoped memory for tpu_custom_call.1']
    #allocation5 [shape = 'u8[8192]{0}', space=vmem, size = 0x2000, scoped, tag = 'input window, operand 1, single buffered']
    #allocation6 [shape = 's32[1]{0}', space=sflag, size = 0x4, scoped, tag = 'scoped memory for tpu_custom_call.1']
    #allocation7 [shape = 'u8[8192]{0}', space=vmem, size = 0x2000, scoped, tag = 'output window, operand 0, single buffered']
    #allocation8 [shape = 'u8[8192]{0}', space=vmem, size = 0x2000, scoped, tag = 'output window, operand 1, single buffered']
    #allocation9 [shape = 's32[1]{0}', space=sflag, size = 0x4, scoped, tag = 'scoped memory for tpu_custom_call.1']
    %9 = vsyncpa [#allocation3], 0
    %10 = vsyncpa [#allocation6], 0
    %11 = vsyncpa [#allocation4], 0
    %12 = vsyncpa [#allocation9], 0
    // Predicated region
    $region2: #{tpu_custom_call.1} parent=1 // pred_check
      _
    $region3: #{tpu_custom_call.1} parent=1 // pred_check_branch
      %14 = sbr.rel (0) target = $region5
    $region4: #{tpu_custom_call.1} parent=1 // pred_region
      %s16 = ssub.s32 256, 256
      %17 = vsyncadd [#allocation3], %s16
      %s18 = sshll.u32 [#allocation2], 4
      %s19 = int_to_ptr.vmem [resolvable:$true] %s18
      %24 = dma.hbm_to_vmem [thread:$0]  %s0, 256, %s19, [#allocation3], 128, 128, 8
    $region5: #{tpu_custom_call.1} parent=1 // pred_fallthru
      _
    // Predicated region
    $region6: #{tpu_custom_call.1} parent=1 // pred_check
      _
    $region7: #{tpu_custom_call.1} parent=1 // pred_check_branch
      %26 = sbr.rel (0) target = $region9
    $region8: #{tpu_custom_call.1} parent=1 // pred_region
      %s28 = ssub.s32 256, 256
      %29 = vsyncadd [#allocation6], %s28
      %s30 = sshll.u32 [#allocation5], 4
      %s31 = int_to_ptr.vmem [resolvable:$true] %s30
      %36 = dma.hbm_to_vmem [thread:$0]  %s1, 256, %s31, [#allocation6], 128, 128, 8
    $region9: #{tpu_custom_call.1} parent=1 // pred_fallthru
      _
    // Predicated region
    $region10: #{tpu_custom_call.1} parent=1 // pred_check
      _
    $region11: #{tpu_custom_call.1} parent=1 // pred_check_branch
      %38 = sbr.rel (0) target = $region13
    $region12: #{tpu_custom_call.1} parent=1 // pred_region
      %39 = dma.done [#allocation3], 256
    $region13: #{tpu_custom_call.1} parent=1 // pred_fallthru
      _
    // Predicated region
    $region14: #{tpu_custom_call.1} parent=1 // pred_check
      _
    $region15: #{tpu_custom_call.1} parent=1 // pred_check_branch
      %41 = sbr.rel (0) target = $region17
    $region16: #{tpu_custom_call.1} parent=1 // pred_region
      %42 = dma.done [#allocation6], 256
    $region17: #{tpu_custom_call.1} parent=1 // pred_fallthru
      _
    %p43 = scmp.eq.s32.totalorder 0, 0
    // Predicated region
    $region18: #{tpu_custom_call.1} parent=1 // pred_check
      %p44 = pneg %p43
    $region19: #{tpu_custom_call.1} parent=1 // pred_check_branch
      %46 = sbr.rel (%p44) target = $region21
    $region20: #{tpu_custom_call.1} parent=1 // pred_region
      %47 = vst [vmem:[#allocation7] sm:$0xff] 0.0
      %48 = vst [vmem:[#allocation7 + $0x8] sm:$0xff] 0.0
      %49 = vst [vmem:[#allocation8] sm:$0xff] 0.0
      %50 = vst [vmem:[#allocation8 + $0x8] sm:$0xff] 0.0
    $region21: #{tpu_custom_call.1} parent=1 // pred_fallthru
      _
    %v51 = vld [vmem:[#allocation2] sm:$0xff]
    %v52 = vld [vmem:[#allocation2 + $0x8] sm:$0xff]
    %v53 = vld [vmem:[#allocation5] sm:$0xff]
    %v54 = vld [vmem:[#allocation5 + $0x8] sm:$0xff]
    %v55 = vmul.f32 %v51, %v53
    %v56 = vmul.f32 %v52, %v54
    %v57 = vmul.f32 %v51, %v51
    %v58 = vmul.f32 %v52, %v52
    %v59 = vmul.f32 %v53, %v53
    %v60 = vmul.f32 %v54, %v54
    %v61 = vadd.f32 %v57, %v59
    %v62 = vadd.f32 %v58, %v60
    %v63 = vld [vmem:[#allocation7] sm:$0xff]
    %v64 = vld [vmem:[#allocation7 + $0x8] sm:$0xff]
    %v65 = vadd.f32 %v63, %v55
    %v66 = vadd.f32 %v64, %v56
    %67 = vst [vmem:[#allocation7] sm:$0xff] %v65
    %68 = vst [vmem:[#allocation7 + $0x8] sm:$0xff] %v66
    %v69 = vld [vmem:[#allocation8] sm:$0xff]
    %v70 = vld [vmem:[#allocation8 + $0x8] sm:$0xff]
    %v71 = vadd.f32 %v69, %v61
    %v72 = vadd.f32 %v70, %v62
    %73 = vst [vmem:[#allocation8] sm:$0xff] %v71
    %74 = vst [vmem:[#allocation8 + $0x8] sm:$0xff] %v72
    // Predicated region
    $region22: #{tpu_custom_call.1} parent=1 // pred_check
      _
    $region23: #{tpu_custom_call.1} parent=1 // pred_check_branch
      %76 = sbr.rel (0) target = $region25
    $region24: #{tpu_custom_call.1} parent=1 // pred_region
      %s78 = ssub.s32 256, 256
      %79 = vsyncadd [#allocation4], %s78
      %s80 = sshll.u32 [#allocation7], 4
      %s81 = int_to_ptr.vmem [resolvable:$true] %s80
      %86 = dma.vmem_to_hbm [thread:$0]  %s81, 256, %s2, [#allocation4], 128, 128, 8
    $region25: #{tpu_custom_call.1} parent=1 // pred_fallthru
      _
    // Predicated region
    $region26: #{tpu_custom_call.1} parent=1 // pred_check
      _
    $region27: #{tpu_custom_call.1} parent=1 // pred_check_branch
      %88 = sbr.rel (0) target = $region29
    $region28: #{tpu_custom_call.1} parent=1 // pred_region
      %s90 = ssub.s32 256, 256
      %91 = vsyncadd [#allocation9], %s90
      %s92 = sshll.u32 [#allocation8], 4
      %s93 = int_to_ptr.vmem [resolvable:$true] %s92
      %98 = dma.vmem_to_hbm [thread:$0]  %s93, 256, %s3, [#allocation9], 128, 128, 8
    $region29: #{tpu_custom_call.1} parent=1 // pred_fallthru
      _
    // Predicated region
    $region30: #{tpu_custom_call.1} parent=1 // pred_check
      _
    $region31: #{tpu_custom_call.1} parent=1 // pred_check_branch
      %100 = sbr.rel (0) target = $region33
    $region32: #{tpu_custom_call.1} parent=1 // pred_region
      %101 = dma.done [#allocation4], 256
    $region33: #{tpu_custom_call.1} parent=1 // pred_fallthru
      _
    // Predicated region
    $region34: #{tpu_custom_call.1} parent=1 // pred_check
      _
    $region35: #{tpu_custom_call.1} parent=1 // pred_check_branch
      %103 = sbr.rel (0) target = $region37
    $region36: #{tpu_custom_call.1} parent=1 // pred_region
      %104 = dma.done [#allocation9], 256
    $region37: #{tpu_custom_call.1} parent=1 // pred_fallthru
      _
    %105 = vsyncpa [#allocation3], 1
    %106 = vsyncpa [#allocation6], 1
    %107 = vsyncpa [#allocation4], 1
    %108 = vsyncpa [#allocation9], 1

</llo_original>
